<compile_context>
chip_gen: v6e
topology: v6e:2x2x1
jax: 0.10.0
libtpu: 0.0.40
codegen_flags: <defaults>
</compile_context>

<pallas_src>
import jax
import jax.numpy as jnp
from jax.experimental import pallas as pl
from jax.experimental.pallas import tpu as pltpu


def _max_pool_fc_kernel(h_ref, m_ref, w_ref, b_ref, o_ref, acc_ref):
    # h_ref:   (bB, bS, H)  float32   hidden-state tile
    # m_ref:   (bB, bS)     int32     attention-mask tile (0 = padding)
    # w_ref:   (H, Cp)      float32   fc weight (padded to lane-dense Cp)
    # b_ref:   (1, Cp)      float32   fc bias   (padded)
    # o_ref:   (bB, Cp)     float32   logits (padded)
    # acc_ref: (bB, H)      float32   running max accumulator (VMEM scratch)
    s = pl.program_id(1)

    @pl.when(s == 0)
    def _():
        acc_ref[...] = jnp.full_like(acc_ref, -jnp.inf)

    h = h_ref[...]
    m = m_ref[...]
    # Replicate torch: last_hidden_state[mask_expanded == 0] = -1e9
    masked = jnp.where(m[..., None] == 0, jnp.float32(-1e9), h)
    tile_max = jnp.max(masked, axis=1)                       # (bB, H)
    acc_ref[...] = jnp.maximum(acc_ref[...], tile_max)

    @pl.when(s == pl.num_programs(1) - 1)
    def _():
        logits = jnp.dot(acc_ref[...], w_ref[...],
                         preferred_element_type=jnp.float32)
        o_ref[...] = logits + b_ref[...]


def _pick_batch_tile(B):
    # Mask/out blocks put bB on the sublane axis: need bB % 8 == 0 or bB == B.
    if B > 8 and B % 8 == 0:
        return 8
    return B


def _pick_seq_tile(S, bB, H, target_bytes=4 * 1024 * 1024):
    # When S is tiled, the mask block puts bS on the lane axis -> bS must be a
    # multiple of 128 dividing S; otherwise fall back to the full sequence.
    if S <= 128:
        return S
    max_bs = max(128, target_bytes // max(1, bB * H * 4))
    cands = [d for d in range(128, S, 128) if S % d == 0 and d <= max_bs]
    if cands:
        return max(cands)
    return S


def max_pooling_forward(last_hidden_state, attention_mask, weight, bias):
    """last_hidden_state: [B, S, H] f32, attention_mask: [B, S] (any int/float 0-1),
    weight: [H, C] f32, bias: [C] f32 -> logits [B, C] f32."""
    B, S, H = last_hidden_state.shape
    C = weight.shape[1]

    # Lane-dense padded class dim for a full-lane output store.
    Cp = max(128, -(-C // 128) * 128)
    w_p = jnp.zeros((H, Cp), jnp.float32).at[:, :C].set(weight.astype(jnp.float32))
    b_p = jnp.zeros((1, Cp), jnp.float32).at[:, :C].set(
        bias.astype(jnp.float32).reshape(1, C))

    mask_i32 = attention_mask.astype(jnp.int32)
    h_f32 = last_hidden_state.astype(jnp.float32)

    bB = _pick_batch_tile(B)
    bS = _pick_seq_tile(S, bB, H)
    grid = (B // bB, S // bS)

    out_padded = pl.pallas_call(
        _max_pool_fc_kernel,
        out_shape=jax.ShapeDtypeStruct((B, Cp), jnp.float32),
        grid_spec=pltpu.PrefetchScalarGridSpec(
            num_scalar_prefetch=0,
            grid=grid,
            in_specs=[
                pl.BlockSpec((bB, bS, H), lambda b, s: (b, s, 0)),
                pl.BlockSpec((bB, bS), lambda b, s: (b, s)),
                pl.BlockSpec((H, Cp), lambda b, s: (0, 0)),   # resident weight
                pl.BlockSpec((1, Cp), lambda b, s: (0, 0)),   # resident bias
            ],
            out_specs=pl.BlockSpec((bB, Cp), lambda b, s: (b, 0)),
            scratch_shapes=[pltpu.VMEM((bB, H), jnp.float32)],
        ),
        compiler_params=pltpu.CompilerParams(
            dimension_semantics=("parallel", "arbitrary")),
    )(h_f32, mask_i32, w_p, b_p)

    return out_padded[:, :C]


if __name__ == "__main__":
    # Small shapes consistent with the module: batch=2, seq=8, hidden=32, classes=4
    B, S, H, C = 2, 8, 32, 4

    key = jax.random.PRNGKey(0)
    k_h, k_w, k_b, _ = jax.random.split(key, 4)

    last_hidden_state = jax.random.normal(k_h, (B, S, H), dtype=jnp.float32)
    # Deterministic attention mask: first batch keeps 6 tokens, second keeps 4.
    lengths = jnp.array([6, 4], dtype=jnp.int32)
    attention_mask = (jnp.arange(S)[None, :] < lengths[:, None]).astype(jnp.int32)

    # Deterministic fc params (nn.Linear(hidden_size, num_classes)).
    weight = jax.random.normal(k_w, (H, C), dtype=jnp.float32) * 0.05
    bias = jax.random.normal(k_b, (C,), dtype=jnp.float32) * 0.01

    out = max_pooling_forward(last_hidden_state, attention_mask, weight, bias)
    out = jax.block_until_ready(out)

    # Reference check in plain JAX (eval-mode semantics).
    masked = jnp.where(attention_mask[..., None] == 0, -1e9, last_hidden_state)
    ref = jnp.max(masked, axis=1) @ weight + bias
    assert out.shape == (B, C)
    assert jnp.allclose(out, ref, atol=1e-5, rtol=1e-5)

    print("KERNEL_OK")
</pallas_src>

<mosaic_0001>
module attributes {stable_mosaic.version = 11 : i64} {
  func.func @_max_pool_fc_kernel(%arg0: i32, %arg1: i32, %arg2: memref<2x8x32xf32, #tpu.memory_space<vmem>>, %arg3: memref<2x8xi32, #tpu.memory_space<vmem>>, %arg4: memref<32x128xf32, #tpu.memory_space<vmem>>, %arg5: memref<1x128xf32, #tpu.memory_space<vmem>>, %arg6: memref<2x128xf32, #tpu.memory_space<vmem>>, %arg7: memref<2x32xf32, #tpu.memory_space<vmem>>) attributes {dimension_semantics = [#tpu.dimension_semantics<parallel>, #tpu.dimension_semantics<arbitrary>], iteration_bounds = array<i64: 1, 1>, scalar_prefetch = 0 : i64, scratch_operands = 1 : i64, tpu.core_type = #tpu.core_type<tc>, window_params = [{transform_indices = @transform_0, window_bounds = array<i64: 2, 8, 32>}, {transform_indices = @transform_1, window_bounds = array<i64: 2, 8>}, {pipeline_mode = #tpu.pipeline_mode<synchronous>, transform_indices = @transform_2, window_bounds = array<i64: 32, 128>}, {pipeline_mode = #tpu.pipeline_mode<synchronous>, transform_indices = @transform_3, window_bounds = array<i64: 1, 128>}, {transform_indices = @transform_4, window_bounds = array<i64: 2, 128>}]} {
    %c0_i32 = arith.constant 0 : i32
    %0 = arith.cmpi eq, %arg1, %c0_i32 : i32
    %1 = arith.extui %0 : i1 to i32
    %c0_i32_0 = arith.constant 0 : i32
    %2 = arith.cmpi ne, %1, %c0_i32_0 : i32
    scf.if %2 {
      %cst_13 = arith.constant 0xFF800000 : f32
      %19 = vector.broadcast %cst_13 : f32 to vector<2x32xf32>
      %c0_14 = arith.constant 0 : index
      %c0_15 = arith.constant 0 : index
      %20 = vector.load %arg7[%c0_14, %c0_15] : memref<2x32xf32, #tpu.memory_space<vmem>>, vector<2x32xf32>
      tpu.vector_store %arg7[%c0_14, %c0_15], %19 {strides = array<i32>} : memref<2x32xf32, #tpu.memory_space<vmem>>, vector<2x32xf32>,
    } else {
    }
    %c0 = arith.constant 0 : index
    %c0_1 = arith.constant 0 : index
    %c0_2 = arith.constant 0 : index
    %3 = vector.load %arg2[%c0, %c0_1, %c0_2] : memref<2x8x32xf32, #tpu.memory_space<vmem>>, vector<2x8x32xf32>
    %c0_3 = arith.constant 0 : index
    %c0_4 = arith.constant 0 : index
    %4 = vector.load %arg3[%c0_3, %c0_4] : memref<2x8xi32, #tpu.memory_space<vmem>>, vector<2x8xi32>
    %5 = vector.shape_cast %4 : vector<2x8xi32> to vector<2x8x1xi32>
    %c0_i32_5 = arith.constant 0 : i32
    %6 = vector.broadcast %c0_i32_5 : i32 to vector<2x8x1xi32>
    %7 = arith.cmpi eq, %5, %6 : vector<2x8x1xi32>
    %cst = arith.constant -1.000000e+09 : f32
    %8 = vector.shape_cast %7 : vector<2x8x1xi1> to vector<2x8x1xi1>
    %9 = vector.broadcast %8 : vector<2x8x1xi1> to vector<2x8x32xi1>
    %10 = vector.broadcast %cst : f32 to vector<2x8x32xf32>
    %11 = arith.select %9, %10, %3 : vector<2x8x32xi1>, vector<2x8x32xf32>
    %cst_6 = arith.constant dense<0xFF800000> : vector<2x32xf32>
    %12 = vector.multi_reduction <maximumf>, %11, %cst_6 [1] : vector<2x8x32xf32> to vector<2x32xf32>
    %c0_7 = arith.constant 0 : index
    %c0_8 = arith.constant 0 : index
    %13 = vector.load %arg7[%c0_7, %c0_8] : memref<2x32xf32, #tpu.memory_space<vmem>>, vector<2x32xf32>
    %14 = arith.maximumf %13, %12 : vector<2x32xf32>
    %c0_9 = arith.constant 0 : index
    %c0_10 = arith.constant 0 : index
    %15 = vector.load %arg7[%c0_9, %c0_10] : memref<2x32xf32, #tpu.memory_space<vmem>>, vector<2x32xf32>
    tpu.vector_store %arg7[%c0_9, %c0_10], %14 {strides = array<i32>} : memref<2x32xf32, #tpu.memory_space<vmem>>, vector<2x32xf32>,
    %c0_i32_11 = arith.constant 0 : i32
    %16 = arith.cmpi eq, %arg1, %c0_i32_11 : i32
    %17 = arith.extui %16 : i1 to i32
    %c0_i32_12 = arith.constant 0 : i32
    %18 = arith.cmpi ne, %17, %c0_i32_12 : i32
    scf.if %18 {
      %c0_13 = arith.constant 0 : index
      %c0_14 = arith.constant 0 : index
      %19 = vector.load %arg7[%c0_13, %c0_14] : memref<2x32xf32, #tpu.memory_space<vmem>>, vector<2x32xf32>
      %c0_15 = arith.constant 0 : index
      %c0_16 = arith.constant 0 : index
      %20 = vector.load %arg4[%c0_15, %c0_16] : memref<32x128xf32, #tpu.memory_space<vmem>>, vector<32x128xf32>
      %cst_17 = arith.constant dense<0.000000e+00> : vector<2x128xf32>
      %21 = tpu.matmul %19, %20, %cst_17 {dimension_numbers = #tpu.dot_dimension_numbers<[1], [0], [0], [1], [0, 0, 1, 1], [], []>} : vector<2x32xf32>, vector<32x128xf32>, vector<2x128xf32> -> vector<2x128xf32>
      %c0_18 = arith.constant 0 : index
      %c0_19 = arith.constant 0 : index
      %22 = vector.load %arg5[%c0_18, %c0_19] : memref<1x128xf32, #tpu.memory_space<vmem>>, vector<1x128xf32>
      %23 = vector.broadcast %22 : vector<1x128xf32> to vector<2x128xf32>
      %24 = arith.addf %21, %23 : vector<2x128xf32>
      %c0_20 = arith.constant 0 : index
      %c0_21 = arith.constant 0 : index
      %25 = vector.load %arg6[%c0_20, %c0_21] : memref<2x128xf32, #tpu.memory_space<vmem>>, vector<2x128xf32>
      tpu.vector_store %arg6[%c0_20, %c0_21], %24 {strides = array<i32>} : memref<2x128xf32, #tpu.memory_space<vmem>>, vector<2x128xf32>,
    } else {
    }
    return
  }
  func.func @transform_0(%arg0: i32, %arg1: i32) -> (i32, i32, i32) {
    %c0_i32 = arith.constant 0 : i32
    %c0_i32_0 = arith.constant 0 : i32
    return %arg0, %arg1, %c0_i32 : i32, i32, i32
  }
  func.func @transform_1(%arg0: i32, %arg1: i32) -> (i32, i32) {
    %c0_i32 = arith.constant 0 : i32
    return %arg0, %arg1 : i32, i32
  }
  func.func @transform_2(%arg0: i32, %arg1: i32) -> (i32, i32) {
    %c0_i32 = arith.constant 0 : i32
    %c0_i32_0 = arith.constant 0 : i32
    %c0_i32_1 = arith.constant 0 : i32
    return %c0_i32, %c0_i32_0 : i32, i32
  }
  func.func @transform_3(%arg0: i32, %arg1: i32) -> (i32, i32) {
    %c0_i32 = arith.constant 0 : i32
    %c0_i32_0 = arith.constant 0 : i32
    %c0_i32_1 = arith.constant 0 : i32
    return %c0_i32, %c0_i32_0 : i32, i32
  }
  func.func @transform_4(%arg0: i32, %arg1: i32) -> (i32, i32) {
    %c0_i32 = arith.constant 0 : i32
    %c0_i32_0 = arith.constant 0 : i32
    return %arg0, %c0_i32 : i32, i32
  }
}

</mosaic_0001>

<llo_original>
// kernel: tpu_custom_call.1
$region0: #{tpu_custom_call.1}
  #allocation0 [shape = 'u32[]', space=smem, size = 0x4, offset = 0x4, fixed_abs, tag = 'smem constant byte address 0x4 - core index']
  #allocation1 [shape = 'u32[144,128]{1,0:T(1,128)}', space=vmem, size = 0x12000, scoped, tag = 'internal scratch']
  #allocation2 [shape = 'f32[2,32]{1,0:T(2,128)}', space=vmem, size = 0x400, scoped, tag = 'scratch operand']
  %s0 = inlined_call_operand.hbm [shape: f32[2,8,32], index: 0, kind: input, shape index: {}]
  %s1 = inlined_call_operand.hbm [shape: s32[2,8], index: 1, kind: input, shape index: {}]
  %s2 = inlined_call_operand.hbm [shape: f32[32,128], index: 2, kind: input, shape index: {}]
  %s3 = inlined_call_operand.vmem [shape: f32[1,128], index: 3, kind: input, shape index: {}]
  %s4 = inlined_call_operand.hbm [shape: f32[2,128], index: 4, kind: output, shape index: {}]
  %s5 = sld [smem:[#allocation0]]
  $region46: #{tpu_custom_call.1} parent=0
    _
  %s7 = ssub.s32 1, %s5
  %s8 = scalar_select 0, %s7, %s5
  $region1: #{tpu_custom_call.1} parent=0
    #allocation3 [shape = 'u8[8192]{0}', space=vmem, size = 0x2000, scoped, tag = 'input window, operand 0, single buffered']
    #allocation4 [shape = 's32[1]{0}', space=sflag, size = 0x4, scoped, tag = 'scoped memory for tpu_custom_call.1']
    #allocation5 [shape = 's32[1]{0}', space=sflag, size = 0x4, scoped, tag = 'scoped memory for tpu_custom_call.1']
    #allocation6 [shape = 'u8[1024]{0}', space=vmem, size = 0x400, scoped, tag = 'input window, operand 1, single buffered']
    #allocation7 [shape = 's32[1]{0}', space=sflag, size = 0x4, scoped, tag = 'scoped memory for tpu_custom_call.1']
    #allocation8 [shape = 'u8[16384]{0}', space=vmem, size = 0x4000, scoped, tag = 'input window, operand 2, single buffered']
    #allocation9 [shape = 'u8[1024]{0}', space=vmem, size = 0x400, scoped, tag = 'output window, operand 0, single buffered']
    %9 = vsyncpa [#allocation4], 0
    %10 = vsyncpa [#allocation7], 0
    %11 = vsyncpa [#allocation5], 0
    // Predicated region
    $region2: #{tpu_custom_call.1} parent=1 // pred_check
      _
    $region3: #{tpu_custom_call.1} parent=1 // pred_check_branch
      %13 = sbr.rel (0) target = $region5
    $region4: #{tpu_custom_call.1} parent=1 // pred_region
      %s15 = ssub.s32 256, 256
      %16 = vsyncadd [#allocation4], %s15
      %s17 = sshll.u32 [#allocation3], 4
      %s18 = int_to_ptr.vmem [resolvable:$true] %s17
      %23 = dma.hbm_to_vmem [thread:$0]  %s0, 256, %s18, [#allocation4], 128, 128, 8
    $region5: #{tpu_custom_call.1} parent=1 // pred_fallthru
      _
    // Predicated region
    $region6: #{tpu_custom_call.1} parent=1 // pred_check
      _
    $region7: #{tpu_custom_call.1} parent=1 // pred_check_branch
      %25 = sbr.rel (0) target = $region9
    $region8: #{tpu_custom_call.1} parent=1 // pred_region
      %s27 = ssub.s32 32, 32
      %28 = vsyncadd [#allocation7], %s27
      %s30 = sshll.u32 [#allocation6], 4
      %s31 = int_to_ptr.vmem [resolvable:$true] %s30
      %33 = dma.hbm_to_vmem [thread:$0]  %s1, 32, %s31, [#allocation7]
    $region9: #{tpu_custom_call.1} parent=1 // pred_fallthru
      _
    // Predicated region
    $region10: #{tpu_custom_call.1} parent=1 // pred_check
      _
    $region11: #{tpu_custom_call.1} parent=1 // pred_check_branch
      %35 = sbr.rel (0) target = $region13
    $region12: #{tpu_custom_call.1} parent=1 // pred_region
      %s37 = ssub.s32 512, 512
      %38 = vsyncadd [#allocation7], %s37
      %s39 = sshll.u32 [#allocation8], 4
      %s40 = int_to_ptr.vmem [resolvable:$true] %s39
      %45 = dma.hbm_to_vmem [thread:$0]  %s2, 512, %s40, [#allocation7], 128, 128, 8
    $region13: #{tpu_custom_call.1} parent=1 // pred_fallthru
      _
    // Predicated region
    $region14: #{tpu_custom_call.1} parent=1 // pred_check
      _
    $region15: #{tpu_custom_call.1} parent=1 // pred_check_branch
      %47 = sbr.rel (0) target = $region17
    $region16: #{tpu_custom_call.1} parent=1 // pred_region
      _
    $region17: #{tpu_custom_call.1} parent=1 // pred_fallthru
      _
    // Predicated region
    $region18: #{tpu_custom_call.1} parent=1 // pred_check
      _
    $region19: #{tpu_custom_call.1} parent=1 // pred_check_branch
      %49 = sbr.rel (0) target = $region21
    $region20: #{tpu_custom_call.1} parent=1 // pred_region
      %50 = dma.done [#allocation4], 256
    $region21: #{tpu_custom_call.1} parent=1 // pred_fallthru
      _
    // Predicated region
    $region22: #{tpu_custom_call.1} parent=1 // pred_check
      _
    $region23: #{tpu_custom_call.1} parent=1 // pred_check_branch
      %52 = sbr.rel (0) target = $region25
    $region24: #{tpu_custom_call.1} parent=1 // pred_region
      %53 = dma.done [#allocation7], 32
    $region25: #{tpu_custom_call.1} parent=1 // pred_fallthru
      _
    // Predicated region
    $region26: #{tpu_custom_call.1} parent=1 // pred_check
      _
    $region27: #{tpu_custom_call.1} parent=1 // pred_check_branch
      %55 = sbr.rel (0) target = $region29
    $region28: #{tpu_custom_call.1} parent=1 // pred_region
      %56 = dma.done [#allocation7], 512
    $region29: #{tpu_custom_call.1} parent=1 // pred_fallthru
      _
    %p57 = scmp.eq.s32.totalorder 0, 0
    // Predicated region
    $region30: #{tpu_custom_call.1} parent=1 // pred_check
      %p58 = pneg %p57
    $region31: #{tpu_custom_call.1} parent=1 // pred_check_branch
      %60 = sbr.rel (%p58) target = $region33
    $region32: #{tpu_custom_call.1} parent=1 // pred_region
      %vm61 = vcmask 254976
      %62 = vst.msk [vmem:[#allocation2] sm:$0x3] %vm61, -inf
    $region33: #{tpu_custom_call.1} parent=1 // pred_fallthru
      _
    %v63 = vld [vmem:[#allocation3] sm:$0xff]
    %v64 = vld [vmem:[#allocation3 + $0x8] sm:$0xff]
    %v65 = vld [vmem:[#allocation6] sm:$0x3]
    %v66 = vlaneseq
    %v67 = vshrl.u32 %v66, 7
    %v68 = vsub.s32 0, %v67
    %v69 = vrot.slane %v65, %v68
    %71 = vbcast.lane.b32.xlu0 %v69, 256
    %v72 = vpop.permute.xlu0 %71
    %v73 = vlaneseq
    %v74 = vshrl.u32 %v73, 7
    %v75 = vsub.s32 1, %v74
    %v76 = vrot.slane %v65, %v75
    %78 = vbcast.lane.b32.xlu0 %v76, 256
    %v79 = vpop.permute.xlu0 %78
    %vm80 = vcmp.eq.s32.totalorder %v72, 0
    %vm81 = vcmp.eq.s32.totalorder %v79, 0
    %v82 = vsel %vm80, 1, 0
    %v83 = vsel %vm81, 1, 0
    %vm84 = vcmp.eq.s32.totalorder %v82, 1
    %vm85 = vcmp.eq.s32.totalorder %v83, 1
    %v86 = vsel %vm84, -1e+09, %v63
    %v87 = vsel %vm85, -1e+09, %v64
    %vm88 = vcmask 261120
    %v89 = vsel %vm88, %v86, -inf
    %v90 = vrot.slane %v89, 4
    %v91 = vmax.f32 %v89, %v90
    %v92 = vrot.slane %v91, 2
    %v93 = vmax.f32 %v91, %v92
    %v94 = vrot.slane %v93, 1
    %v95 = vmax.f32 %v93, %v94
    %v96 = vsel %vm88, %v87, -inf
    %v97 = vrot.slane %v96, 4
    %v98 = vmax.f32 %v96, %v97
    %v99 = vrot.slane %v98, 2
    %v100 = vmax.f32 %v98, %v99
    %v101 = vrot.slane %v100, 1
    %v102 = vmax.f32 %v100, %v101
    %v103 = vld [vmem:[#allocation2] sm:$0x3]
    %vm106 = vcmask 1041409
    %v107 = vsel %vm106, %v102, %v95
    %v109 = vmax.f32 %v103, %v107
    %vm110 = vcmask 254976
    %111 = vst.msk [vmem:[#allocation2] sm:$0x3] %vm110, %v109
    // Predicated region
    $region34: #{tpu_custom_call.1} parent=1 // pred_check
      %p112 = pneg %p57
    $region35: #{tpu_custom_call.1} parent=1 // pred_check_branch
      %114 = sbr.rel (%p112) target = $region37
    $region36: #{tpu_custom_call.1} parent=1 // pred_region
      %v115 = vld [vmem:[#allocation2] sm:$0x3]
      %v116 = vld [vmem:[#allocation8] sm:$0xff]
      %v117 = vld [vmem:[#allocation8 + $0x8] sm:$0xff]
      %v118 = vld [vmem:[#allocation8 + $0x10] sm:$0xff]
      %v119 = vld [vmem:[#allocation8 + $0x18] sm:$0xff]
      %v120 = vld [vmem:[%s3] sm:$0x1]
      %v122 = vlaneseq
      %v123 = vshrl.u32 %v122, 7
      %v124 = vsub.s32 0, %v123
      %v125 = vrot.slane %v120, %v124
      %v128 = vsel %vm88, %v115, 0
      %130 = vmatprep.subr.mxu0 0.0
      %131 = vmatpush1.msra.mxu0 0.0
      %132 = vmatprep.subr.mxu0 0.0
      %133 = vmatpush1.msra.mxu0 0.0
      %134 = vmatprep.subr.mxu0 0.0
      %135 = vmatpush1.msra.mxu0 0.0
      %136 = vmatprep.subr.mxu0 0.0
      %137 = vmatpush1.msra.mxu0 0.0
      %138 = vmatprep.subr.mxu0 0.0
      %139 = vmatpush1.msra.mxu0 0.0
      %140 = vmatprep.subr.mxu0 0.0
      %141 = vmatpush1.msra.mxu0 0.0
      %142 = vmatprep.subr.mxu0 0.0
      %143 = vmatpush1.msra.mxu0 0.0
      %144 = vmatprep.subr.mxu0 0.0
      %145 = vmatpush1.msra.mxu0 0.0
      %146 = vmatprep.subr.mxu0 0.0
      %147 = vmatpush1.msra.mxu0 0.0
      %148 = vmatprep.subr.mxu0 0.0
      %149 = vmatpush1.msra.mxu0 0.0
      %150 = vmatprep.subr.mxu0 0.0
      %151 = vmatpush1.msra.mxu0 0.0
      %152 = vmatprep.subr.mxu0 0.0
      %153 = vmatpush1.msra.mxu0 0.0
      %154 = vmatprep.subr.mxu0 0.0
      %155 = vmatpush1.msra.mxu0 %v119
      %156 = vmatprep.subr.mxu0 0.0
      %157 = vmatpush1.msra.mxu0 %v118
      %158 = vmatprep.subr.mxu0 0.0
      %159 = vmatpush1.msra.mxu0 %v117
      %160 = vmatprep.subr.mxu0 0.0
      %161 = vmatpush1.msra.mxu0 %v116
      %162 = vmatprep.subr.mxu0 0.0
      %163 = vmatpush2.msra.mxu0 0.0
      %164 = vmatprep.subr.mxu0 0.0
      %165 = vmatpush2.msra.mxu0 0.0
      %166 = vmatprep.subr.mxu0 0.0
      %167 = vmatpush2.msra.mxu0 0.0
      %168 = vmatprep.subr.mxu0 0.0
      %169 = vmatpush2.msra.mxu0 0.0
      %170 = vmatprep.subr.mxu0 0.0
      %171 = vmatpush2.msra.mxu0 0.0
      %172 = vmatprep.subr.mxu0 0.0
      %173 = vmatpush2.msra.mxu0 0.0
      %174 = vmatprep.subr.mxu0 0.0
      %175 = vmatpush2.msra.mxu0 0.0
      %176 = vmatprep.subr.mxu0 0.0
      %177 = vmatpush2.msra.mxu0 0.0
      %178 = vmatprep.subr.mxu0 0.0
      %179 = vmatpush2.msra.mxu0 0.0
      %180 = vmatprep.subr.mxu0 0.0
      %181 = vmatpush2.msra.mxu0 0.0
      %182 = vmatprep.subr.mxu0 0.0
      %183 = vmatpush2.msra.mxu0 0.0
      %184 = vmatprep.subr.mxu0 0.0
      %185 = vmatpush2.msra.mxu0 0.0
      %186 = vmatprep.subr.mxu0 0.0
      %187 = vmatpush2.msra.mxu0 0.0
      %188 = vmatprep.subr.mxu0 0.0
      %189 = vmatpush2.msra.mxu0 0.0
      %190 = vmatprep.subr.mxu0 0.0
      %191 = vmatpush2.msra.mxu0 0.0
      %192 = vmatprep.subr.mxu0 0.0
      %193 = vmatpush2.msra.mxu0 0.0
      %194 = vmatprep.mubr.f32.mxu0 0.0
      %195 = vmatmul.mubr.f32.gmra.mxu0 %v128
      %v196 = vpop.f32.mrf.mxu0
      %v197 = vadd.f32 %v125, %v196
      %v198 = vpop.f32.mrf.mxu0
      %199 = vdwg.mxu0
      %200 = vst [vmem:[#allocation9] sm:$0x3] %v197
    $region37: #{tpu_custom_call.1} parent=1 // pred_fallthru
      _
    // Predicated region
    $region38: #{tpu_custom_call.1} parent=1 // pred_check
      _
    $region39: #{tpu_custom_call.1} parent=1 // pred_check_branch
      %202 = sbr.rel (0) target = $region41
    $region40: #{tpu_custom_call.1} parent=1 // pred_region
      %s204 = ssub.s32 32, 32
      %205 = vsyncadd [#allocation5], %s204
      %s207 = sshll.u32 [#allocation9], 4
      %s208 = int_to_ptr.vmem [resolvable:$true] %s207
      %210 = dma.vmem_to_hbm [thread:$0]  %s208, 32, %s4, [#allocation5]
    $region41: #{tpu_custom_call.1} parent=1 // pred_fallthru
      _
    // Predicated region
    $region42: #{tpu_custom_call.1} parent=1 // pred_check
      _
    $region43: #{tpu_custom_call.1} parent=1 // pred_check_branch
      %212 = sbr.rel (0) target = $region45
    $region44: #{tpu_custom_call.1} parent=1 // pred_region
      %213 = dma.done [#allocation5], 32
    $region45: #{tpu_custom_call.1} parent=1 // pred_fallthru
      _
    %214 = vsyncpa [#allocation4], 1
    %215 = vsyncpa [#allocation7], 1
    %216 = vsyncpa [#allocation5], 1

</llo_original>
